<compile_context>
chip_gen: v5e
topology: v5e:2x2
jax: 0.10.0
libtpu: 0.0.40
codegen_flags: <defaults>
</compile_context>

<pallas_src>
import functools

import jax
import jax.numpy as jnp
from jax.experimental import pallas as pl
from jax.experimental.pallas import tpu as pltpu

NUM_BODIES = 5
INPUT_SIZE = 2 * NUM_BODIES + 3      # 13
IN_PAD = 16                          # K padded to bf16 sublane-pack granularity
HIDDEN_SIZE = 256
OUTPUT_SIZE = 2 * NUM_BODIES         # 10
OUT_PAD = 128                        # lane-dense padded output width
MXU_ROWS = 256                       # MXU row granularity (v6e/v7x)


def _round_up(n, m):
    return ((n + m - 1) // m) * m


def _default_max_tm():
    # v7x (64 MiB VMEM/TC): cap at 512 rows; v5e/v6e (128 MiB): allow larger tiles.
    try:
        vmem = pltpu.get_tpu_info().vmem_capacity_bytes
        return 512 if vmem <= 64 * 1024 * 1024 else 2048
    except Exception:
        return 512


MAX_TM = _default_max_tm()


def _mlp_kernel(x_ref, w1_ref, b1_ref, w2_ref, b2_ref, w3_ref, b3_ref, o_ref):
    # Three back-to-back bf16 MXU matmuls with f32 accumulation; bias adds and
    # ReLU fuse on the VPU.  Inputs arrive already bf16 (no in-kernel casts of x).
    h1 = jnp.dot(x_ref[...], w1_ref[...], preferred_element_type=jnp.float32)
    h1 = jnp.maximum(h1 + b1_ref[...], 0.0).astype(jnp.bfloat16)

    h2 = jnp.dot(h1, w2_ref[...], preferred_element_type=jnp.float32)
    h2 = jnp.maximum(h2 + b2_ref[...], 0.0).astype(jnp.bfloat16)

    out = jnp.dot(h2, w3_ref[...], preferred_element_type=jnp.float32) + b3_ref[...]
    o_ref[...] = out.astype(o_ref.dtype)   # (TM, 128) lane-dense, unmasked store


def prepare_params(params):
    """One-time prep of kernel-ready params (do NOT call per forward pass):
    bf16 weights, K padded 13->16, output projection padded 10->128 lanes."""
    w1 = jnp.pad(params["w1"].astype(jnp.bfloat16),
                 ((0, IN_PAD - INPUT_SIZE), (0, 0)))
    w2 = params["w2"].astype(jnp.bfloat16)
    w3 = jnp.pad(params["w3"].astype(jnp.bfloat16),
                 ((0, 0), (0, OUT_PAD - OUTPUT_SIZE)))
    b1 = params["b1"].astype(jnp.float32).reshape(1, HIDDEN_SIZE)
    b2 = params["b2"].astype(jnp.float32).reshape(1, HIDDEN_SIZE)
    b3 = jnp.pad(params["b3"].astype(jnp.float32).reshape(1, OUTPUT_SIZE),
                 ((0, 0), (0, OUT_PAD - OUTPUT_SIZE)))
    return {"w1": w1, "b1": b1, "w2": w2, "b2": b2, "w3": w3, "b3": b3}


def _pick_tile(batch):
    """Pick (tm, padded_batch).  Tiny batches: one minimal tile (latency-bound).
    Larger batches: MXU-row-aligned tiles and >= 2 grid steps so the 'parallel'
    axis shards across v7x's two TensorCores."""
    b16 = _round_up(max(batch, 1), 16)          # bf16 sublane packing alignment
    if b16 <= MXU_ROWS:
        return b16, b16
    tm = min(MAX_TM, _round_up(pl.cdiv(b16, 2), MXU_ROWS))
    b_pad = _round_up(b16, tm)
    return tm, b_pad


@functools.partial(jax.jit, static_argnames=("tm",))
def generative_model_forward(x, kparams, tm=None):
    """x: (B, INPUT_SIZE) float32.  kparams: output of prepare_params()."""
    B = x.shape[0]
    if tm is None:
        tm, b_pad = _pick_tile(B)
    else:
        assert tm % 16 == 0, "tm must be a multiple of 16 (bf16 sublane packing)"
        b_pad = _round_up(max(B, 1), tm)

    # Single fused XLA op: cast activations to bf16 and pad (batch->b_pad, K->16).
    x = jnp.pad(x.astype(jnp.bfloat16),
                ((0, b_pad - B), (0, IN_PAD - INPUT_SIZE)))

    w1, b1 = kparams["w1"], kparams["b1"]
    w2, b2 = kparams["w2"], kparams["b2"]
    w3, b3 = kparams["w3"], kparams["b3"]

    grid = (b_pad // tm,)

    # Weights/biases: full-array blocks with a constant index_map -> DMA'd once,
    # VMEM-resident across all grid steps.
    def const_spec(a):
        return pl.BlockSpec(a.shape, lambda i: (0,) * a.ndim)

    out_padded = pl.pallas_call(
        _mlp_kernel,
        out_shape=jax.ShapeDtypeStruct((b_pad, OUT_PAD), jnp.float32),
        grid=grid,
        in_specs=[
            pl.BlockSpec((tm, IN_PAD), lambda i: (i, 0)),   # streamed x tiles
            const_spec(w1), const_spec(b1),
            const_spec(w2), const_spec(b2),
            const_spec(w3), const_spec(b3),
        ],
        out_specs=pl.BlockSpec((tm, OUT_PAD), lambda i: (i, 0)),
        compiler_params=pltpu.CompilerParams(
            dimension_semantics=("parallel",),
            vmem_limit_bytes=32 * 1024 * 1024,
        ),
    )(x, w1, b1, w2, b2, w3, b3)

    # NOTE: this slice is a separate copy; latency-critical callers can take the
    # padded (b_pad, 128) buffer directly and slice lazily downstream.
    return out_padded[:B, :OUTPUT_SIZE]


def init_params(key):
    """Deterministic synthetic init matching nn.Linear's default
    U(-1/sqrt(fan_in), 1/sqrt(fan_in)) ranges; weights stored (in, out)."""
    ks = jax.random.split(key, 6)

    def linear(kw, kb, fan_in, fan_out):
        bound = 1.0 / jnp.sqrt(float(fan_in))
        w = jax.random.uniform(kw, (fan_in, fan_out), jnp.float32, -bound, bound)
        b = jax.random.uniform(kb, (1, fan_out), jnp.float32, -bound, bound)
        return w, b

    w1, b1 = linear(ks[0], ks[1], INPUT_SIZE, HIDDEN_SIZE)
    w2, b2 = linear(ks[2], ks[3], HIDDEN_SIZE, HIDDEN_SIZE)
    w3, b3 = linear(ks[4], ks[5], HIDDEN_SIZE, OUTPUT_SIZE)
    return {"w1": w1, "b1": b1, "w2": w2, "b2": b2, "w3": w3, "b3": b3}


def reference_forward_bf16(x, p):
    """JAX reference with the same bf16-weight / f32-accumulate numerics.
    (A pure-f32 PyTorch forward would differ at ~1e-2 relative level.)"""
    bf = jnp.bfloat16
    h1 = jnp.dot(x.astype(bf), p["w1"].astype(bf),
                 preferred_element_type=jnp.float32) + p["b1"]
    h1 = jnp.maximum(h1, 0.0)
    h2 = jnp.dot(h1.astype(bf), p["w2"].astype(bf),
                 preferred_element_type=jnp.float32) + p["b2"]
    h2 = jnp.maximum(h2, 0.0)
    return jnp.dot(h2.astype(bf), p["w3"].astype(bf),
                   preferred_element_type=jnp.float32) + p["b3"]


if __name__ == "__main__":
    key = jax.random.PRNGKey(0)
    kx, kp = jax.random.split(key)

    params = init_params(kp)
    kparams = prepare_params(params)   # one-time bf16 cast + padding

    # Small single-tile path (latency-bound regime).
    batch = 8
    x = jax.random.normal(kx, (batch, INPUT_SIZE), jnp.float32)
    out = jax.block_until_ready(generative_model_forward(x, kparams))
    ref = reference_forward_bf16(x, params)
    assert out.shape == (batch, OUTPUT_SIZE)
    assert jnp.allclose(out, ref, atol=1e-3, rtol=1e-3), "mismatch (small batch)"

    # Multi-tile path: batch > 256 -> >= 2 grid steps (exercises both TCs on v7x).
    batch2 = 272
    x2 = jax.random.normal(kx, (batch2, INPUT_SIZE), jnp.float32)
    out2 = jax.block_until_ready(generative_model_forward(x2, kparams))
    ref2 = reference_forward_bf16(x2, params)
    assert out2.shape == (batch2, OUTPUT_SIZE)
    assert jnp.allclose(out2, ref2, atol=1e-3, rtol=1e-3), "mismatch (multi-tile)"

    print("KERNEL_OK")
</pallas_src>

<mosaic_0001>
module attributes {stable_mosaic.version = 11 : i64} {
  func.func @_mlp_kernel(%arg0: i32, %arg1: memref<16x16xbf16, #tpu.memory_space<vmem>>, %arg2: memref<16x256xbf16, #tpu.memory_space<vmem>>, %arg3: memref<1x256xf32, #tpu.memory_space<vmem>>, %arg4: memref<256x256xbf16, #tpu.memory_space<vmem>>, %arg5: memref<1x256xf32, #tpu.memory_space<vmem>>, %arg6: memref<256x128xbf16, #tpu.memory_space<vmem>>, %arg7: memref<1x128xf32, #tpu.memory_space<vmem>>, %arg8: memref<16x128xf32, #tpu.memory_space<vmem>>) attributes {dimension_semantics = [#tpu.dimension_semantics<parallel>], iteration_bounds = array<i64: 1>, scalar_prefetch = 0 : i64, scratch_operands = 0 : i64, tpu.core_type = #tpu.core_type<tc>, window_params = [{transform_indices = @transform_0, window_bounds = array<i64: 16, 16>}, {pipeline_mode = #tpu.pipeline_mode<synchronous>, transform_indices = @transform_1, window_bounds = array<i64: 16, 256>}, {pipeline_mode = #tpu.pipeline_mode<synchronous>, transform_indices = @transform_2, window_bounds = array<i64: 1, 256>}, {pipeline_mode = #tpu.pipeline_mode<synchronous>, transform_indices = @transform_3, window_bounds = array<i64: 256, 256>}, {pipeline_mode = #tpu.pipeline_mode<synchronous>, transform_indices = @transform_4, window_bounds = array<i64: 1, 256>}, {pipeline_mode = #tpu.pipeline_mode<synchronous>, transform_indices = @transform_5, window_bounds = array<i64: 256, 128>}, {pipeline_mode = #tpu.pipeline_mode<synchronous>, transform_indices = @transform_6, window_bounds = array<i64: 1, 128>}, {transform_indices = @transform_7, window_bounds = array<i64: 16, 128>}]} {
    %c0 = arith.constant 0 : index
    %c0_0 = arith.constant 0 : index
    %0 = vector.load %arg1[%c0, %c0_0] : memref<16x16xbf16, #tpu.memory_space<vmem>>, vector<16x16xbf16>
    %c0_1 = arith.constant 0 : index
    %c0_2 = arith.constant 0 : index
    %1 = vector.load %arg2[%c0_1, %c0_2] : memref<16x256xbf16, #tpu.memory_space<vmem>>, vector<16x256xbf16>
    %cst = arith.constant dense<0.000000e+00> : vector<16x256xf32>
    %2 = tpu.matmul %0, %1, %cst {dimension_numbers = #tpu.dot_dimension_numbers<[1], [0], [0], [1], [0, 0, 1, 1], [], []>} : vector<16x16xbf16>, vector<16x256xbf16>, vector<16x256xf32> -> vector<16x256xf32>
    %c0_3 = arith.constant 0 : index
    %c0_4 = arith.constant 0 : index
    %3 = vector.load %arg3[%c0_3, %c0_4] : memref<1x256xf32, #tpu.memory_space<vmem>>, vector<1x256xf32>
    %4 = vector.broadcast %3 : vector<1x256xf32> to vector<16x256xf32>
    %5 = arith.addf %2, %4 : vector<16x256xf32>
    %cst_5 = arith.constant 0.000000e+00 : f32
    %6 = vector.broadcast %cst_5 : f32 to vector<16x256xf32>
    %7 = arith.maximumf %5, %6 : vector<16x256xf32>
    %8 = arith.truncf %7 : vector<16x256xf32> to vector<16x256xbf16>
    %c0_6 = arith.constant 0 : index
    %c0_7 = arith.constant 0 : index
    %9 = vector.load %arg4[%c0_6, %c0_7] : memref<256x256xbf16, #tpu.memory_space<vmem>>, vector<256x256xbf16>
    %cst_8 = arith.constant dense<0.000000e+00> : vector<16x256xf32>
    %10 = tpu.matmul %8, %9, %cst_8 {dimension_numbers = #tpu.dot_dimension_numbers<[1], [0], [0], [1], [0, 0, 1, 1], [], []>} : vector<16x256xbf16>, vector<256x256xbf16>, vector<16x256xf32> -> vector<16x256xf32>
    %c0_9 = arith.constant 0 : index
    %c0_10 = arith.constant 0 : index
    %11 = vector.load %arg5[%c0_9, %c0_10] : memref<1x256xf32, #tpu.memory_space<vmem>>, vector<1x256xf32>
    %12 = vector.broadcast %11 : vector<1x256xf32> to vector<16x256xf32>
    %13 = arith.addf %10, %12 : vector<16x256xf32>
    %cst_11 = arith.constant 0.000000e+00 : f32
    %14 = vector.broadcast %cst_11 : f32 to vector<16x256xf32>
    %15 = arith.maximumf %13, %14 : vector<16x256xf32>
    %16 = arith.truncf %15 : vector<16x256xf32> to vector<16x256xbf16>
    %c0_12 = arith.constant 0 : index
    %c0_13 = arith.constant 0 : index
    %17 = vector.load %arg6[%c0_12, %c0_13] : memref<256x128xbf16, #tpu.memory_space<vmem>>, vector<256x128xbf16>
    %cst_14 = arith.constant dense<0.000000e+00> : vector<16x128xf32>
    %18 = tpu.matmul %16, %17, %cst_14 {dimension_numbers = #tpu.dot_dimension_numbers<[1], [0], [0], [1], [0, 0, 1, 1], [], []>} : vector<16x256xbf16>, vector<256x128xbf16>, vector<16x128xf32> -> vector<16x128xf32>
    %c0_15 = arith.constant 0 : index
    %c0_16 = arith.constant 0 : index
    %19 = vector.load %arg7[%c0_15, %c0_16] : memref<1x128xf32, #tpu.memory_space<vmem>>, vector<1x128xf32>
    %20 = vector.broadcast %19 : vector<1x128xf32> to vector<16x128xf32>
    %21 = arith.addf %18, %20 : vector<16x128xf32>
    %c0_17 = arith.constant 0 : index
    %c0_18 = arith.constant 0 : index
    %22 = vector.load %arg8[%c0_17, %c0_18] : memref<16x128xf32, #tpu.memory_space<vmem>>, vector<16x128xf32>
    tpu.vector_store %arg8[%c0_17, %c0_18], %21 {strides = array<i32>} : memref<16x128xf32, #tpu.memory_space<vmem>>, vector<16x128xf32>,
    return
  }
  func.func @transform_0(%arg0: i32) -> (i32, i32) {
    %c0_i32 = arith.constant 0 : i32
    %c0_i32_0 = arith.constant 0 : i32
    return %arg0, %c0_i32 : i32, i32
  }
  func.func @transform_1(%arg0: i32) -> (i32, i32) {
    %c0_i32 = arith.constant 0 : i32
    %c0_i32_0 = arith.constant 0 : i32
    %c0_i32_1 = arith.constant 0 : i32
    return %c0_i32, %c0_i32_0 : i32, i32
  }
  func.func @transform_2(%arg0: i32) -> (i32, i32) {
    %c0_i32 = arith.constant 0 : i32
    %c0_i32_0 = arith.constant 0 : i32
    %c0_i32_1 = arith.constant 0 : i32
    return %c0_i32, %c0_i32_0 : i32, i32
  }
  func.func @transform_3(%arg0: i32) -> (i32, i32) {
    %c0_i32 = arith.constant 0 : i32
    %c0_i32_0 = arith.constant 0 : i32
    %c0_i32_1 = arith.constant 0 : i32
    return %c0_i32, %c0_i32_0 : i32, i32
  }
  func.func @transform_4(%arg0: i32) -> (i32, i32) {
    %c0_i32 = arith.constant 0 : i32
    %c0_i32_0 = arith.constant 0 : i32
    %c0_i32_1 = arith.constant 0 : i32
    return %c0_i32, %c0_i32_0 : i32, i32
  }
  func.func @transform_5(%arg0: i32) -> (i32, i32) {
    %c0_i32 = arith.constant 0 : i32
    %c0_i32_0 = arith.constant 0 : i32
    %c0_i32_1 = arith.constant 0 : i32
    return %c0_i32, %c0_i32_0 : i32, i32
  }
  func.func @transform_6(%arg0: i32) -> (i32, i32) {
    %c0_i32 = arith.constant 0 : i32
    %c0_i32_0 = arith.constant 0 : i32
    %c0_i32_1 = arith.constant 0 : i32
    return %c0_i32, %c0_i32_0 : i32, i32
  }
  func.func @transform_7(%arg0: i32) -> (i32, i32) {
    %c0_i32 = arith.constant 0 : i32
    %c0_i32_0 = arith.constant 0 : i32
    return %arg0, %c0_i32 : i32, i32
  }
}

</mosaic_0001>

<llo_original>
// kernel: generative_model_forward.1
$region0: #{generative_model_forward.1}
  #allocation0 [shape = 'u32[]', space=smem, size = 0x4, offset = 0x4, fixed_abs, tag = 'smem constant byte address 0x4 - core index']
  #allocation1 [shape = 'u32[72,128]{1,0:T(1,128)}', space=vmem, size = 0x9000, scoped, tag = 'internal scratch']
  %s0 = inlined_call_operand.vmem [shape: bf16[16,16], index: 0, kind: input, shape index: {}]
  %s1 = inlined_call_operand.vmem [shape: bf16[16,256], index: 1, kind: input, shape index: {}]
  %s2 = inlined_call_operand.vmem [shape: f32[1,256], index: 2, kind: input, shape index: {}]
  %s3 = inlined_call_operand.hbm [shape: bf16[256,256], index: 3, kind: input, shape index: {}]
  %s4 = inlined_call_operand.vmem [shape: f32[1,256], index: 4, kind: input, shape index: {}]
  %s5 = inlined_call_operand.hbm [shape: bf16[256,128], index: 5, kind: input, shape index: {}]
  %s6 = inlined_call_operand.vmem [shape: f32[1,128], index: 6, kind: input, shape index: {}]
  %s7 = inlined_call_operand.vmem [shape: f32[16,128], index: 7, kind: output, shape index: {}]
  %s8 = sld [smem:[#allocation0]]
  $region46: #{generative_model_forward.1} parent=0
    _
  %s10 = ssub.s32 1, %s8
  %s11 = scalar_select 0, %s10, %s8
  $region1: #{generative_model_forward.1} parent=0
    #allocation2 [shape = 'u8[131072]{0}', space=vmem, size = 0x20000, scoped, tag = 'input window, operand 3, single buffered']
    #allocation3 [shape = 's32[1]{0}', space=sflag, size = 0x4, scoped, tag = 'scoped memory for generative_model_forward.1']
    #allocation4 [shape = 'u8[65536]{0}', space=vmem, size = 0x10000, scoped, tag = 'input window, operand 5, single buffered']
    #allocation5 [shape = 's32[1]{0}', space=sflag, size = 0x4, scoped, tag = 'scoped memory for generative_model_forward.1']
    %12 = vsyncpa [#allocation3], 0
    %13 = vsyncpa [#allocation5], 0
    // Predicated region
    $region2: #{generative_model_forward.1} parent=1 // pred_check
      _
    $region3: #{generative_model_forward.1} parent=1 // pred_check_branch
      %15 = sbr.rel (0) target = $region5
    $region4: #{generative_model_forward.1} parent=1 // pred_region
      _
    $region5: #{generative_model_forward.1} parent=1 // pred_fallthru
      _
    // Predicated region
    $region6: #{generative_model_forward.1} parent=1 // pred_check
      _
    $region7: #{generative_model_forward.1} parent=1 // pred_check_branch
      %17 = sbr.rel (0) target = $region9
    $region8: #{generative_model_forward.1} parent=1 // pred_region
      _
    $region9: #{generative_model_forward.1} parent=1 // pred_fallthru
      _
    // Predicated region
    $region10: #{generative_model_forward.1} parent=1 // pred_check
      _
    $region11: #{generative_model_forward.1} parent=1 // pred_check_branch
      %19 = sbr.rel (0) target = $region13
    $region12: #{generative_model_forward.1} parent=1 // pred_region
      _
    $region13: #{generative_model_forward.1} parent=1 // pred_fallthru
      _
    // Predicated region
    $region14: #{generative_model_forward.1} parent=1 // pred_check
      _
    $region15: #{generative_model_forward.1} parent=1 // pred_check_branch
      %21 = sbr.rel (0) target = $region17
    $region16: #{generative_model_forward.1} parent=1 // pred_region
      %23 = vsyncadd [#allocation3], 0
      %s24 = sshll.u32 %s3, 4
      %s25 = int_to_ptr.hbm [resolvable:$true] %s24
      %s26 = sshll.u32 [#allocation2], 4
      %s27 = int_to_ptr.vmem [resolvable:$true] %s26
      %32 = dma.hbm_to_vmem [thread:$0]  %s25, 4096, %s27, [#allocation3], 128, 128, 8
    $region17: #{generative_model_forward.1} parent=1 // pred_fallthru
      _
    // Predicated region
    $region18: #{generative_model_forward.1} parent=1 // pred_check
      _
    $region19: #{generative_model_forward.1} parent=1 // pred_check_branch
      %34 = sbr.rel (0) target = $region21
    $region20: #{generative_model_forward.1} parent=1 // pred_region
      _
    $region21: #{generative_model_forward.1} parent=1 // pred_fallthru
      _
    // Predicated region
    $region22: #{generative_model_forward.1} parent=1 // pred_check
      _
    $region23: #{generative_model_forward.1} parent=1 // pred_check_branch
      %36 = sbr.rel (0) target = $region25
    $region24: #{generative_model_forward.1} parent=1 // pred_region
      %38 = vsyncadd [#allocation5], 0
      %s39 = sshll.u32 %s5, 4
      %s40 = int_to_ptr.hbm [resolvable:$true] %s39
      %s41 = sshll.u32 [#allocation4], 4
      %s42 = int_to_ptr.vmem [resolvable:$true] %s41
      %47 = dma.hbm_to_vmem [thread:$0]  %s40, 2048, %s42, [#allocation5], 64, 64, 4
    $region25: #{generative_model_forward.1} parent=1 // pred_fallthru
      _
    // Predicated region
    $region26: #{generative_model_forward.1} parent=1 // pred_check
      _
    $region27: #{generative_model_forward.1} parent=1 // pred_check_branch
      %49 = sbr.rel (0) target = $region29
    $region28: #{generative_model_forward.1} parent=1 // pred_region
      _
    $region29: #{generative_model_forward.1} parent=1 // pred_fallthru
      _
    // Predicated region
    $region30: #{generative_model_forward.1} parent=1 // pred_check
      _
    $region31: #{generative_model_forward.1} parent=1 // pred_check_branch
      %51 = sbr.rel (0) target = $region33
    $region32: #{generative_model_forward.1} parent=1 // pred_region
      %53 = dma.done [#allocation3], 4096
    $region33: #{generative_model_forward.1} parent=1 // pred_fallthru
      _
    // Predicated region
    $region34: #{generative_model_forward.1} parent=1 // pred_check
      _
    $region35: #{generative_model_forward.1} parent=1 // pred_check_branch
      %55 = sbr.rel (0) target = $region37
    $region36: #{generative_model_forward.1} parent=1 // pred_region
      %57 = dma.done [#allocation5], 2048
    $region37: #{generative_model_forward.1} parent=1 // pred_fallthru
      _
    %v59 = vld [vmem:[%s0] sm:$0xf]
    %v60 = vld [vmem:[%s0 + $0x4] sm:$0xf]
    %v61 = vld [vmem:[%s1] sm:$0xff]
    %v62 = vld [vmem:[%s1 + $0x8] sm:$0xff]
    %v63 = vld [vmem:[%s2] sm:$0x3]
    %v65 = vperm.slane %v63, 0
    %v66 = vperm.slane %v63, 1
    %v71 = vunpack.c.l.b16 %v59
    %v72 = vunpack.c.l.b16 %v60
    %v73 = vpack.c.b16 %v72, %v71
    %v76 = vunpack.c.l.b16 %v61
    %v77 = vunpack.c.h.b16 %v61
    %v78 = vunpack.c.l.b16 %v62
    %v79 = vunpack.c.h.b16 %v62
    %v80 = vpack.c.b16 %v78, %v76
    %v81 = vpack.c.b16 %v79, %v77
    %vm84 = vcmask 130048
    %v86 = vsel %vm84, %v73, 0
    %88 = vmatpush.bf16.msra.mxu0 0
    %89 = vmatpush.bf16.msra.mxu0 0
    %90 = vmatpush.bf16.msra.mxu0 0
    %91 = vmatpush.bf16.msra.mxu0 0
    %92 = vmatpush.bf16.msra.mxu0 0
    %93 = vmatpush.bf16.msra.mxu0 0
    %94 = vmatpush.bf16.msra.mxu0 0
    %95 = vmatpush.bf16.msra.mxu0 %v80
    %96 = vmatmul.bf16.gmra.mxu0 %v86
    %v97 = vpop.f32.mrf.mxu0
    %v98 = vadd.f32 %v65, %v97
    %v99 = vpop.f32.mrf.mxu0
    %v100 = vadd.f32 %v65, %v99
    %101 = vdwg.mxu0
    %102 = vmatpush.bf16.msra.mxu0 0
    %103 = vmatpush.bf16.msra.mxu0 0
    %104 = vmatpush.bf16.msra.mxu0 0
    %105 = vmatpush.bf16.msra.mxu0 0
    %106 = vmatpush.bf16.msra.mxu0 0
    %107 = vmatpush.bf16.msra.mxu0 0
    %108 = vmatpush.bf16.msra.mxu0 0
    %109 = vmatpush.bf16.msra.mxu0 %v81
    %110 = vmatmul.bf16.gmra.mxu0 %v86
    %v111 = vpop.f32.mrf.mxu0
    %v112 = vadd.f32 %v66, %v111
    %v113 = vpop.f32.mrf.mxu0
    %v114 = vadd.f32 %v66, %v113
    %115 = vdwg.mxu0
    %v116 = vmax.f32 %v98, 0.0
    %v117 = vmax.f32 %v112, 0.0
    %v118 = vmax.f32 %v100, 0.0
    %v119 = vmax.f32 %v114, 0.0
    %v120 = vpack.c.bf16 %v118, %v116
    %v121 = vpack.c.bf16 %v119, %v117
    %v122 = vld [vmem:[#allocation2] sm:$0xff]
    %v123 = vld [vmem:[#allocation2 + $0x8] sm:$0xff]
    %v124 = vld [vmem:[#allocation2 + $0x10] sm:$0xff]
    %v125 = vld [vmem:[#allocation2 + $0x18] sm:$0xff]
    %v126 = vld [vmem:[#allocation2 + $0x20] sm:$0xff]
    %v127 = vld [vmem:[#allocation2 + $0x28] sm:$0xff]
    %v128 = vld [vmem:[#allocation2 + $0x30] sm:$0xff]
    %v129 = vld [vmem:[#allocation2 + $0x38] sm:$0xff]
    %v130 = vld [vmem:[#allocation2 + $0x40] sm:$0xff]
    %v131 = vld [vmem:[#allocation2 + $0x48] sm:$0xff]
    %v132 = vld [vmem:[#allocation2 + $0x50] sm:$0xff]
    %v133 = vld [vmem:[#allocation2 + $0x58] sm:$0xff]
    %v134 = vld [vmem:[#allocation2 + $0x60] sm:$0xff]
    %v135 = vld [vmem:[#allocation2 + $0x68] sm:$0xff]
    %v136 = vld [vmem:[#allocation2 + $0x70] sm:$0xff]
    %v137 = vld [vmem:[#allocation2 + $0x78] sm:$0xff]
    %v138 = vld [vmem:[#allocation2 + $0x80] sm:$0xff]
    %v139 = vld [vmem:[#allocation2 + $0x88] sm:$0xff]
    %v140 = vld [vmem:[#allocation2 + $0x90] sm:$0xff]
    %v141 = vld [vmem:[#allocation2 + $0x98] sm:$0xff]
    %v142 = vld [vmem:[#allocation2 + $0xa0] sm:$0xff]
    %v143 = vld [vmem:[#allocation2 + $0xa8] sm:$0xff]
    %v144 = vld [vmem:[#allocation2 + $0xb0] sm:$0xff]
    %v145 = vld [vmem:[#allocation2 + $0xb8] sm:$0xff]
    %v146 = vld [vmem:[#allocation2 + $0xc0] sm:$0xff]
    %v147 = vld [vmem:[#allocation2 + $0xc8] sm:$0xff]
    %v148 = vld [vmem:[#allocation2 + $0xd0] sm:$0xff]
    %v149 = vld [vmem:[#allocation2 + $0xd8] sm:$0xff]
    %v150 = vld [vmem:[#allocation2 + $0xe0] sm:$0xff]
    %v151 = vld [vmem:[#allocation2 + $0xe8] sm:$0xff]
    %v152 = vld [vmem:[#allocation2 + $0xf0] sm:$0xff]
    %v153 = vld [vmem:[#allocation2 + $0xf8] sm:$0xff]
    %v154 = vld [vmem:[%s4] sm:$0x3]
    %v156 = vperm.slane %v154, 0
    %v157 = vperm.slane %v154, 1
    %v192 = vunpack.c.l.b16 %v122
    %v193 = vunpack.c.h.b16 %v122
    %v194 = vunpack.c.l.b16 %v123
    %v195 = vunpack.c.h.b16 %v123
    %v196 = vunpack.c.l.b16 %v124
    %v197 = vunpack.c.h.b16 %v124
    %v198 = vunpack.c.l.b16 %v125
    %v199 = vunpack.c.h.b16 %v125
    %v200 = vunpack.c.l.b16 %v126
    %v201 = vunpack.c.h.b16 %v126
    %v202 = vunpack.c.l.b16 %v127
    %v203 = vunpack.c.h.b16 %v127
    %v204 = vunpack.c.l.b16 %v128
    %v205 = vunpack.c.h.b16 %v128
    %v206 = vunpack.c.l.b16 %v129
    %v207 = vunpack.c.h.b16 %v129
    %v208 = vunpack.c.l.b16 %v130
    %v209 = vunpack.c.h.b16 %v130
    %v210 = vunpack.c.l.b16 %v131
    %v211 = vunpack.c.h.b16 %v131
    %v212 = vunpack.c.l.b16 %v132
    %v213 = vunpack.c.h.b16 %v132
    %v214 = vunpack.c.l.b16 %v133
    %v215 = vunpack.c.h.b16 %v133
    %v216 = vunpack.c.l.b16 %v134
    %v217 = vunpack.c.h.b16 %v134
    %v218 = vunpack.c.l.b16 %v135
    %v219 = vunpack.c.h.b16 %v135
    %v220 = vunpack.c.l.b16 %v136
    %v221 = vunpack.c.h.b16 %v136
    %v222 = vunpack.c.l.b16 %v137
    %v223 = vunpack.c.h.b16 %v137
    %v224 = vunpack.c.l.b16 %v138
    %v225 = vunpack.c.h.b16 %v138
    %v226 = vunpack.c.l.b16 %v139
    %v227 = vunpack.c.h.b16 %v139
    %v228 = vunpack.c.l.b16 %v140
    %v229 = vunpack.c.h.b16 %v140
    %v230 = vunpack.c.l.b16 %v141
    %v231 = vunpack.c.h.b16 %v141
    %v232 = vunpack.c.l.b16 %v142
    %v233 = vunpack.c.h.b16 %v142
    %v234 = vunpack.c.l.b16 %v143
    %v235 = vunpack.c.h.b16 %v143
    %v236 = vunpack.c.l.b16 %v144
    %v237 = vunpack.c.h.b16 %v144
    %v238 = vunpack.c.l.b16 %v145
    %v239 = vunpack.c.h.b16 %v145
    %v240 = vunpack.c.l.b16 %v146
    %v241 = vunpack.c.h.b16 %v146
    %v242 = vunpack.c.l.b16 %v147
    %v243 = vunpack.c.h.b16 %v147
    %v244 = vunpack.c.l.b16 %v148
    %v245 = vunpack.c.h.b16 %v148
    %v246 = vunpack.c.l.b16 %v149
    %v247 = vunpack.c.h.b16 %v149
    %v248 = vunpack.c.l.b16 %v150
    %v249 = vunpack.c.h.b16 %v150
    %v250 = vunpack.c.l.b16 %v151
    %v251 = vunpack.c.h.b16 %v151
    %v252 = vunpack.c.l.b16 %v152
    %v253 = vunpack.c.h.b16 %v152
    %v254 = vunpack.c.l.b16 %v153
    %v255 = vunpack.c.h.b16 %v153
    %v256 = vpack.c.b16 %v194, %v192
    %v257 = vpack.c.b16 %v195, %v193
    %v258 = vpack.c.b16 %v198, %v196
    %v259 = vpack.c.b16 %v199, %v197
    %v260 = vpack.c.b16 %v202, %v200
    %v261 = vpack.c.b16 %v203, %v201
    %v262 = vpack.c.b16 %v206, %v204
    %v263 = vpack.c.b16 %v207, %v205
    %v264 = vpack.c.b16 %v210, %v208
    %v265 = vpack.c.b16 %v211, %v209
    %v266 = vpack.c.b16 %v214, %v212
    %v267 = vpack.c.b16 %v215, %v213
    %v268 = vpack.c.b16 %v218, %v216
    %v269 = vpack.c.b16 %v219, %v217
    %v270 = vpack.c.b16 %v222, %v220
    %v271 = vpack.c.b16 %v223, %v221
    %v272 = vpack.c.b16 %v226, %v224
    %v273 = vpack.c.b16 %v227, %v225
    %v274 = vpack.c.b16 %v230, %v228
    %v275 = vpack.c.b16 %v231, %v229
    %v276 = vpack.c.b16 %v234, %v232
    %v277 = vpack.c.b16 %v235, %v233
    %v278 = vpack.c.b16 %v238, %v236
    %v279 = vpack.c.b16 %v239, %v237
    %v280 = vpack.c.b16 %v242, %v240
    %v281 = vpack.c.b16 %v243, %v241
    %v282 = vpack.c.b16 %v246, %v244
    %v283 = vpack.c.b16 %v247, %v245
    %v284 = vpack.c.b16 %v250, %v248
    %v285 = vpack.c.b16 %v251, %v249
    %v286 = vpack.c.b16 %v254, %v252
    %v287 = vpack.c.b16 %v255, %v253
    %320 = vmatpush.bf16.msra.mxu0 %v270
    %321 = vmatpush.bf16.msra.mxu0 %v268
    %322 = vmatpush.bf16.msra.mxu0 %v266
    %323 = vmatpush.bf16.msra.mxu0 %v264
    %324 = vmatpush.bf16.msra.mxu0 %v262
    %325 = vmatpush.bf16.msra.mxu0 %v260
    %326 = vmatpush.bf16.msra.mxu0 %v258
    %327 = vmatpush.bf16.msra.mxu0 %v256
    %328 = vmatmul.bf16.gmra.mxu0 %v120
    %v329 = vpop.f32.mrf.mxu0
    %v330 = vadd.f32 %v156, %v329
    %v331 = vpop.f32.mrf.mxu0
    %v332 = vadd.f32 %v156, %v331
    %333 = vdwg.mxu0
    %334 = vmatpush.bf16.msra.mxu0 %v286
    %335 = vmatpush.bf16.msra.mxu0 %v284
    %336 = vmatpush.bf16.msra.mxu0 %v282
    %337 = vmatpush.bf16.msra.mxu0 %v280
    %338 = vmatpush.bf16.msra.mxu0 %v278
    %339 = vmatpush.bf16.msra.mxu0 %v276
    %340 = vmatpush.bf16.msra.mxu0 %v274
    %341 = vmatpush.bf16.msra.mxu0 %v272
    %342 = vmatmul.bf16.gmra.mxu0 %v121
    %v343 = vpop.f32.mrf.mxu0
    %v344 = vadd.f32 %v330, %v343
    %v345 = vpop.f32.mrf.mxu0
    %v346 = vadd.f32 %v332, %v345
    %347 = vdwg.mxu0
    %348 = vmatpush.bf16.msra.mxu0 %v271
    %349 = vmatpush.bf16.msra.mxu0 %v269
    %350 = vmatpush.bf16.msra.mxu0 %v267
    %351 = vmatpush.bf16.msra.mxu0 %v265
    %352 = vmatpush.bf16.msra.mxu0 %v263
    %353 = vmatpush.bf16.msra.mxu0 %v261
    %354 = vmatpush.bf16.msra.mxu0 %v259
    %355 = vmatpush.bf16.msra.mxu0 %v257
    %356 = vmatmul.bf16.gmra.mxu0 %v120
    %v357 = vpop.f32.mrf.mxu0
    %v358 = vadd.f32 %v157, %v357
    %v359 = vpop.f32.mrf.mxu0
    %v360 = vadd.f32 %v157, %v359
    %361 = vdwg.mxu0
    %362 = vmatpush.bf16.msra.mxu0 %v287
    %363 = vmatpush.bf16.msra.mxu0 %v285
    %364 = vmatpush.bf16.msra.mxu0 %v283
    %365 = vmatpush.bf16.msra.mxu0 %v281
    %366 = vmatpush.bf16.msra.mxu0 %v279
    %367 = vmatpush.bf16.msra.mxu0 %v277
    %368 = vmatpush.bf16.msra.mxu0 %v275
    %369 = vmatpush.bf16.msra.mxu0 %v273
    %370 = vmatmul.bf16.gmra.mxu0 %v121
    %v371 = vpop.f32.mrf.mxu0
    %v372 = vadd.f32 %v358, %v371
    %v373 = vpop.f32.mrf.mxu0
    %v374 = vadd.f32 %v360, %v373
    %375 = vdwg.mxu0
    %v376 = vmax.f32 %v344, 0.0
    %v377 = vmax.f32 %v372, 0.0
    %v378 = vmax.f32 %v346, 0.0
    %v379 = vmax.f32 %v374, 0.0
    %v380 = vpack.c.bf16 %v378, %v376
    %v381 = vpack.c.bf16 %v379, %v377
    %v382 = vld [vmem:[#allocation4] sm:$0xf]
    %v383 = vld [vmem:[#allocation4 + $0x4] sm:$0xf]
    %v384 = vld [vmem:[#allocation4 + $0x8] sm:$0xf]
    %v385 = vld [vmem:[#allocation4 + $0xc] sm:$0xf]
    %v386 = vld [vmem:[#allocation4 + $0x10] sm:$0xf]
    %v387 = vld [vmem:[#allocation4 + $0x14] sm:$0xf]
    %v388 = vld [vmem:[#allocation4 + $0x18] sm:$0xf]
    %v389 = vld [vmem:[#allocation4 + $0x1c] sm:$0xf]
    %v390 = vld [vmem:[#allocation4 + $0x20] sm:$0xf]
    %v391 = vld [vmem:[#allocation4 + $0x24] sm:$0xf]
    %v392 = vld [vmem:[#allocation4 + $0x28] sm:$0xf]
    %v393 = vld [vmem:[#allocation4 + $0x2c] sm:$0xf]
    %v394 = vld [vmem:[#allocation4 + $0x30] sm:$0xf]
    %v395 = vld [vmem:[#allocation4 + $0x34] sm:$0xf]
    %v396 = vld [vmem:[#allocation4 + $0x38] sm:$0xf]
    %v397 = vld [vmem:[#allocation4 + $0x3c] sm:$0xf]
    %v398 = vld [vmem:[#allocation4 + $0x40] sm:$0xf]
    %v399 = vld [vmem:[#allocation4 + $0x44] sm:$0xf]
    %v400 = vld [vmem:[#allocation4 + $0x48] sm:$0xf]
    %v401 = vld [vmem:[#allocation4 + $0x4c] sm:$0xf]
    %v402 = vld [vmem:[#allocation4 + $0x50] sm:$0xf]
    %v403 = vld [vmem:[#allocation4 + $0x54] sm:$0xf]
    %v404 = vld [vmem:[#allocation4 + $0x58] sm:$0xf]
    %v405 = vld [vmem:[#allocation4 + $0x5c] sm:$0xf]
    %v406 = vld [vmem:[#allocation4 + $0x60] sm:$0xf]
    %v407 = vld [vmem:[#allocation4 + $0x64] sm:$0xf]
    %v408 = vld [vmem:[#allocation4 + $0x68] sm:$0xf]
    %v409 = vld [vmem:[#allocation4 + $0x6c] sm:$0xf]
    %v410 = vld [vmem:[#allocation4 + $0x70] sm:$0xf]
    %v411 = vld [vmem:[#allocation4 + $0x74] sm:$0xf]
    %v412 = vld [vmem:[#allocation4 + $0x78] sm:$0xf]
    %v413 = vld [vmem:[#allocation4 + $0x7c] sm:$0xf]
    %v414 = vld [vmem:[%s6] sm:$0x1]
    %v416 = vperm.slane %v414, 0
    %v450 = vunpack.c.l.b16 %v382
    %v451 = vunpack.c.l.b16 %v383
    %v452 = vunpack.c.l.b16 %v384
    %v453 = vunpack.c.l.b16 %v385
    %v454 = vunpack.c.l.b16 %v386
    %v455 = vunpack.c.l.b16 %v387
    %v456 = vunpack.c.l.b16 %v388
    %v457 = vunpack.c.l.b16 %v389
    %v458 = vunpack.c.l.b16 %v390
    %v459 = vunpack.c.l.b16 %v391
    %v460 = vunpack.c.l.b16 %v392
    %v461 = vunpack.c.l.b16 %v393
    %v462 = vunpack.c.l.b16 %v394
    %v463 = vunpack.c.l.b16 %v395
    %v464 = vunpack.c.l.b16 %v396
    %v465 = vunpack.c.l.b16 %v397
    %v466 = vunpack.c.l.b16 %v398
    %v467 = vunpack.c.l.b16 %v399
    %v468 = vunpack.c.l.b16 %v400
    %v469 = vunpack.c.l.b16 %v401
    %v470 = vunpack.c.l.b16 %v402
    %v471 = vunpack.c.l.b16 %v403
    %v472 = vunpack.c.l.b16 %v404
    %v473 = vunpack.c.l.b16 %v405
    %v474 = vunpack.c.l.b16 %v406
    %v475 = vunpack.c.l.b16 %v407
    %v476 = vunpack.c.l.b16 %v408
    %v477 = vunpack.c.l.b16 %v409
    %v478 = vunpack.c.l.b16 %v410
    %v479 = vunpack.c.l.b16 %v411
    %v480 = vunpack.c.l.b16 %v412
    %v481 = vunpack.c.l.b16 %v413
    %v482 = vpack.c.b16 %v451, %v450
    %v483 = vpack.c.b16 %v453, %v452
    %v484 = vpack.c.b16 %v455, %v454
    %v485 = vpack.c.b16 %v457, %v456
    %v486 = vpack.c.b16 %v459, %v458
    %v487 = vpack.c.b16 %v461, %v460
    %v488 = vpack.c.b16 %v463, %v462
    %v489 = vpack.c.b16 %v465, %v464
    %v490 = vpack.c.b16 %v467, %v466
    %v491 = vpack.c.b16 %v469, %v468
    %v492 = vpack.c.b16 %v471, %v470
    %v493 = vpack.c.b16 %v473, %v472
    %v494 = vpack.c.b16 %v475, %v474
    %v495 = vpack.c.b16 %v477, %v476
    %v496 = vpack.c.b16 %v479, %v478
    %v497 = vpack.c.b16 %v481, %v480
    %514 = vmatpush.bf16.msra.mxu0 %v489
    %515 = vmatpush.bf16.msra.mxu0 %v488
    %516 = vmatpush.bf16.msra.mxu0 %v487
    %517 = vmatpush.bf16.msra.mxu0 %v486
    %518 = vmatpush.bf16.msra.mxu0 %v485
    %519 = vmatpush.bf16.msra.mxu0 %v484
    %520 = vmatpush.bf16.msra.mxu0 %v483
    %521 = vmatpush.bf16.msra.mxu0 %v482
    %522 = vmatmul.bf16.gmra.mxu0 %v380
    %v523 = vpop.f32.mrf.mxu0
    %v524 = vadd.f32 %v416, %v523
    %v525 = vpop.f32.mrf.mxu0
    %v526 = vadd.f32 %v416, %v525
    %527 = vdwg.mxu0
    %528 = vmatpush.bf16.msra.mxu0 %v497
    %529 = vmatpush.bf16.msra.mxu0 %v496
    %530 = vmatpush.bf16.msra.mxu0 %v495
    %531 = vmatpush.bf16.msra.mxu0 %v494
    %532 = vmatpush.bf16.msra.mxu0 %v493
    %533 = vmatpush.bf16.msra.mxu0 %v492
    %534 = vmatpush.bf16.msra.mxu0 %v491
    %535 = vmatpush.bf16.msra.mxu0 %v490
    %536 = vmatmul.bf16.gmra.mxu0 %v381
    %v537 = vpop.f32.mrf.mxu0
    %v538 = vadd.f32 %v524, %v537
    %v539 = vpop.f32.mrf.mxu0
    %v540 = vadd.f32 %v526, %v539
    %541 = vdwg.mxu0
    %542 = vst [vmem:[%s7] sm:$0xff] %v538
    %543 = vst [vmem:[%s7 + $0x8] sm:$0xff] %v540
    // Predicated region
    $region38: #{generative_model_forward.1} parent=1 // pred_check
      _
    $region39: #{generative_model_forward.1} parent=1 // pred_check_branch
      %545 = sbr.rel (0) target = $region41
    $region40: #{generative_model_forward.1} parent=1 // pred_region
      _
    $region41: #{generative_model_forward.1} parent=1 // pred_fallthru
      _
    // Predicated region
    $region42: #{generative_model_forward.1} parent=1 // pred_check
      _
    $region43: #{generative_model_forward.1} parent=1 // pred_check_branch
      %547 = sbr.rel (0) target = $region45
    $region44: #{generative_model_forward.1} parent=1 // pred_region
      _
    $region45: #{generative_model_forward.1} parent=1 // pred_fallthru
      _
    %548 = vsyncpa [#allocation3], 1
    %549 = vsyncpa [#allocation5], 1

</llo_original>
